<compile_context>
chip_gen: v5e
topology: v5e:2x2
jax: 0.10.0
libtpu: 0.0.40
codegen_flags: <defaults>
</compile_context>

<pallas_src>
import functools

import jax
import jax.numpy as jnp
import numpy as np
from jax.experimental import pallas as pl
from jax.experimental.pallas import tpu as pltpu


def _pick_tile(n, cap=128):
    """Largest tile <= cap that divides n and is a multiple of 8 (else n)."""
    if n <= cap:
        return n
    best = 0
    for t in range(8, cap + 1, 8):
        if n % t == 0:
            best = t
    return best if best else n


def _weight_spec(shape, index_map, single_buffer):
    # Weights / biases have constant index maps (fetched once); single-buffer
    # them so they don't burn 2x VMEM on a buffer that is never refilled.
    if single_buffer:
        return pl.BlockSpec(shape, index_map, pipeline_mode=pl.Buffered(1))
    return pl.BlockSpec(shape, index_map)


# ----------------------------------------------------------------------------
# Kernel 1: QKV projection (bf16 MXU dots, lane-aligned per-tensor outputs).
# ----------------------------------------------------------------------------
def _qkv_proj_kernel(x_ref, wq_ref, wk_ref, wv_ref, q_ref, k_ref, v_ref):
    x = x_ref[0]                                                # (TS, H) bf16
    q_ref[0] = jnp.dot(x, wq_ref[...],
                       preferred_element_type=jnp.float32).astype(q_ref.dtype)
    k_ref[0] = jnp.dot(x, wk_ref[...],
                       preferred_element_type=jnp.float32).astype(k_ref.dtype)
    v_ref[0] = jnp.dot(x, wv_ref[...],
                       preferred_element_type=jnp.float32).astype(v_ref.dtype)


# ----------------------------------------------------------------------------
# Kernel 2: flash-style attention + output projection + FFN.
# ----------------------------------------------------------------------------
def _attn_ffn_kernel(q_ref, k_ref, v_ref, wo_ref, bo_ref, w1_ref, b1_ref,
                     w2_ref, b2_ref, o_ref, m_sc, l_sc, acc_sc, *, num_heads):
    ki = pl.program_id(2)

    @pl.when(ki == 0)
    def _init():
        m_sc[...] = jnp.full(m_sc.shape, -jnp.inf, jnp.float32)
        l_sc[...] = jnp.zeros(l_sc.shape, jnp.float32)
        acc_sc[...] = jnp.zeros(acc_sc.shape, jnp.float32)

    q = q_ref[0]                        # (nh, TQ, hd) bf16, scale pre-folded
    k = k_ref[0]                        # (nh, TK, hd) bf16
    v = v_ref[0]                        # (nh, TK, hd) bf16

    # All heads in one batched MXU contraction, f32 accumulation.
    s = jnp.einsum("nqd,nkd->nqk", q, k,
                   preferred_element_type=jnp.float32)          # (nh, TQ, TK)

    # Online (flash) softmax update, f32 math.
    m_prev = m_sc[...]
    m_new = jnp.maximum(m_prev, jnp.max(s, axis=-1, keepdims=True))
    alpha = jnp.exp(m_prev - m_new)
    p = jnp.exp(s - m_new)
    l_sc[...] = alpha * l_sc[...] + jnp.sum(p, axis=-1, keepdims=True)
    acc_sc[...] = alpha * acc_sc[...] + jnp.einsum(
        "nqk,nkd->nqd", p.astype(v.dtype), v,
        preferred_element_type=jnp.float32)
    m_sc[...] = m_new

    @pl.when(ki == pl.num_programs(2) - 1)
    def _finalize():
        # EUP reciprocal instead of a VPU divide.
        inv_l = pl.reciprocal(l_sc[...], approx=True)           # (nh, TQ, 1)
        attn = (acc_sc[...] * inv_l).astype(jnp.bfloat16)       # (nh, TQ, hd)

        # Merge heads *through* the output projection:
        #   y = sum_n attn[n] @ Wo[n]
        # accumulating into a single (TQ, H) f32 tile — no lane-axis concat,
        # no sub-128-lane stores, bounded live ranges.
        tq, hdim = o_ref.shape[1], o_ref.shape[2]
        y = jnp.zeros((tq, hdim), jnp.float32)
        for n in range(num_heads):
            y = y + jnp.dot(attn[n], wo_ref[n],
                            preferred_element_type=jnp.float32)
        y = y + bo_ref[...]

        # Feedforward: Linear -> ReLU -> Linear (dropout = identity).
        h1 = jnp.dot(y.astype(jnp.bfloat16), w1_ref[...],
                     preferred_element_type=jnp.float32) + b1_ref[...]
        h1 = jnp.maximum(h1, 0.0)
        out = jnp.dot(h1.astype(jnp.bfloat16), w2_ref[...],
                      preferred_element_type=jnp.float32) + b2_ref[...]

        o_ref[0] = out.astype(o_ref.dtype)                      # lane-dense slab


def _forward_impl(x, params, num_heads, single_buffer_weights):
    B, S, H = x.shape
    hd = H // num_heads
    scale = hd ** (-0.5)
    wq, wk, wv, wo, bo, w1, b1, w2, b2 = params
    ff = w1.shape[1]
    sb = single_buffer_weights

    # ----- wrapper-side dtype / layout plumbing (no compute hoisting) -----
    x_b = x.astype(jnp.bfloat16)
    wq_b = (wq * scale).astype(jnp.bfloat16)      # fold 1/sqrt(hd) into W_q
    wk_b = wk.astype(jnp.bfloat16)
    wv_b = wv.astype(jnp.bfloat16)
    wo_h = wo.reshape(num_heads, hd, H).astype(jnp.bfloat16)   # per-head Wo
    w1_b = w1.astype(jnp.bfloat16)
    w2_b = w2.astype(jnp.bfloat16)

    ts = _pick_tile(S)
    tq = _pick_tile(S)
    tk = _pick_tile(S)
    vmem_limit = 64 * 1024 * 1024

    # ----- kernel 1: QKV projection -----
    q, k, v = pl.pallas_call(
        _qkv_proj_kernel,
        out_shape=tuple(jax.ShapeDtypeStruct((B, S, H), jnp.bfloat16)
                        for _ in range(3)),
        grid_spec=pltpu.PrefetchScalarGridSpec(
            num_scalar_prefetch=0,
            grid=(B, S // ts),
            in_specs=[
                pl.BlockSpec((1, ts, H), lambda b, s: (b, s, 0)),
                _weight_spec((H, H), lambda b, s: (0, 0), sb),
                _weight_spec((H, H), lambda b, s: (0, 0), sb),
                _weight_spec((H, H), lambda b, s: (0, 0), sb),
            ],
            out_specs=tuple(pl.BlockSpec((1, ts, H), lambda b, s: (b, s, 0))
                            for _ in range(3)),
        ),
        compiler_params=pltpu.CompilerParams(
            dimension_semantics=("parallel", "parallel"),
            vmem_limit_bytes=vmem_limit),
    )(x_b, wq_b, wk_b, wv_b)

    # Head-major relayout (B, S, H) -> (B, nh, S, hd): layout plumbing only.
    def to_heads(t):
        return t.reshape(B, S, num_heads, hd).transpose(0, 2, 1, 3)

    qh, kh, vh = to_heads(q), to_heads(k), to_heads(v)

    # ----- kernel 2: flash attention + out-proj + FFN -----
    kernel = functools.partial(_attn_ffn_kernel, num_heads=num_heads)
    out = pl.pallas_call(
        kernel,
        out_shape=jax.ShapeDtypeStruct((B, S, H), x.dtype),
        grid_spec=pltpu.PrefetchScalarGridSpec(
            num_scalar_prefetch=0,
            grid=(B, S // tq, S // tk),
            in_specs=[
                pl.BlockSpec((1, num_heads, tq, hd),
                             lambda b, qi, ki: (b, 0, qi, 0)),
                pl.BlockSpec((1, num_heads, tk, hd),
                             lambda b, qi, ki: (b, 0, ki, 0)),
                pl.BlockSpec((1, num_heads, tk, hd),
                             lambda b, qi, ki: (b, 0, ki, 0)),
                _weight_spec((num_heads, hd, H),
                             lambda b, qi, ki: (0, 0, 0), sb),
                _weight_spec((1, H), lambda b, qi, ki: (0, 0), sb),
                _weight_spec((H, ff), lambda b, qi, ki: (0, 0), sb),
                _weight_spec((1, ff), lambda b, qi, ki: (0, 0), sb),
                _weight_spec((ff, H), lambda b, qi, ki: (0, 0), sb),
                _weight_spec((1, H), lambda b, qi, ki: (0, 0), sb),
            ],
            out_specs=pl.BlockSpec((1, tq, H), lambda b, qi, ki: (b, qi, 0)),
            scratch_shapes=[
                pltpu.VMEM((num_heads, tq, 1), jnp.float32),    # running max m
                pltpu.VMEM((num_heads, tq, 1), jnp.float32),    # running sum l
                pltpu.VMEM((num_heads, tq, hd), jnp.float32),   # unnormalized acc
            ],
        ),
        compiler_params=pltpu.CompilerParams(
            dimension_semantics=("parallel", "parallel", "arbitrary"),
            vmem_limit_bytes=vmem_limit),
    )(qh, kh, vh, wo_h, bo, w1_b, b1, w2_b, b2)
    return out


def sparse_attention_forward(x, params, num_heads):
    try:
        return _forward_impl(x, params, num_heads, single_buffer_weights=True)
    except Exception:
        # TODO(synk): fallback if this JAX build rejects pl.Buffered(1)
        # single-buffering of the resident weights (correctness unchanged).
        return _forward_impl(x, params, num_heads, single_buffer_weights=False)


def ref_forward(x, params, num_heads):
    """Pure-JAX f32 reference of the intended PyTorch forward (eval mode)."""
    wq, wk, wv, wo, bo, w1, b1, w2, b2 = params
    B, S, H = x.shape
    hd = H // num_heads
    scale = hd ** (-0.5)
    q, k, v = x @ wq, x @ wk, x @ wv

    def split(t):
        return t.reshape(B, S, num_heads, hd).transpose(0, 2, 1, 3)

    q, k, v = split(q), split(k), split(v)
    s = jnp.einsum("bhqd,bhkd->bhqk", q, k) * scale
    p = jax.nn.softmax(s, axis=-1)
    o = jnp.einsum("bhqk,bhkd->bhqd", p, v).transpose(0, 2, 1, 3).reshape(B, S, H)
    y = o @ wo + bo
    h1 = jnp.maximum(y @ w1 + b1, 0.0)
    return h1 @ w2 + b2


def init_params(key, hidden_dim, feedforward_dim):
    """Deterministic synthetic parameters (PyTorch (out,in) weights, then transposed)."""
    ks = jax.random.split(key, 7)
    scale = 0.05
    w_qkv = jax.random.normal(ks[0], (3 * hidden_dim, hidden_dim), jnp.float32) * scale
    w_out = jax.random.normal(ks[1], (hidden_dim, hidden_dim), jnp.float32) * scale
    b_out = jax.random.normal(ks[2], (hidden_dim,), jnp.float32) * scale
    w_ff1 = jax.random.normal(ks[3], (feedforward_dim, hidden_dim), jnp.float32) * scale
    b_ff1 = jax.random.normal(ks[4], (feedforward_dim,), jnp.float32) * scale
    w_ff2 = jax.random.normal(ks[5], (hidden_dim, feedforward_dim), jnp.float32) * scale
    b_ff2 = jax.random.normal(ks[6], (hidden_dim,), jnp.float32) * scale
    # PyTorch Linear weights are (out, in); transpose to (in, out).  The fused
    # qkv weight's output thirds are q / k / v respectively (head-major inside).
    wq = w_qkv[:hidden_dim].T
    wk = w_qkv[hidden_dim:2 * hidden_dim].T
    wv = w_qkv[2 * hidden_dim:].T
    return (wq, wk, wv, w_out.T, b_out[None, :],
            w_ff1.T, b_ff1[None, :], w_ff2.T, b_ff2[None, :])


if __name__ == "__main__":
    # Small, module-consistent shapes.
    batch, seq_len, hidden_dim, num_heads = 2, 8, 32, 4
    feedforward_dim = hidden_dim * 2          # default: hidden_dim * 2
    dropout_prob = 0.1                        # identity at inference

    key = jax.random.PRNGKey(0)
    k_x, k_p = jax.random.split(key)
    x = jax.random.normal(k_x, (batch, seq_len, hidden_dim), jnp.float32)
    params = init_params(k_p, hidden_dim, feedforward_dim)

    out = sparse_attention_forward(x, params, num_heads)
    out = jax.block_until_ready(out)

    ref = ref_forward(x, params, num_heads)
    # Kernel uses bf16 MXU operands (f32 accumulation); compare against the
    # f32 reference with a bf16-appropriate tolerance.
    np.testing.assert_allclose(np.asarray(out), np.asarray(ref),
                               rtol=2e-2, atol=2e-2)

    print("KERNEL_OK")
</pallas_src>

<mosaic_0001>
module attributes {stable_mosaic.version = 11 : i64} {
  func.func @_qkv_proj_kernel(%arg0: i32, %arg1: i32, %arg2: memref<1x8x32xbf16, #tpu.memory_space<vmem>>, %arg3: memref<32x32xbf16, #tpu.memory_space<vmem>>, %arg4: memref<32x32xbf16, #tpu.memory_space<vmem>>, %arg5: memref<32x32xbf16, #tpu.memory_space<vmem>>, %arg6: memref<1x8x32xbf16, #tpu.memory_space<vmem>>, %arg7: memref<1x8x32xbf16, #tpu.memory_space<vmem>>, %arg8: memref<1x8x32xbf16, #tpu.memory_space<vmem>>) attributes {dimension_semantics = [#tpu.dimension_semantics<parallel>, #tpu.dimension_semantics<parallel>], iteration_bounds = array<i64: 2, 1>, scalar_prefetch = 0 : i64, scratch_operands = 0 : i64, tpu.core_type = #tpu.core_type<tc>, window_params = [{transform_indices = @transform_0, window_bounds = array<i64: 1, 8, 32>}, {pipeline_mode = #tpu.pipeline_mode<synchronous>, transform_indices = @transform_1, window_bounds = array<i64: 32, 32>}, {pipeline_mode = #tpu.pipeline_mode<synchronous>, transform_indices = @transform_2, window_bounds = array<i64: 32, 32>}, {pipeline_mode = #tpu.pipeline_mode<synchronous>, transform_indices = @transform_3, window_bounds = array<i64: 32, 32>}, {transform_indices = @transform_4, window_bounds = array<i64: 1, 8, 32>}, {transform_indices = @transform_5, window_bounds = array<i64: 1, 8, 32>}, {transform_indices = @transform_6, window_bounds = array<i64: 1, 8, 32>}]} {
    %c0 = arith.constant 0 : index
    %c0_0 = arith.constant 0 : index
    %c0_1 = arith.constant 0 : index
    %0 = vector.load %arg2[%c0, %c0_0, %c0_1] : memref<1x8x32xbf16, #tpu.memory_space<vmem>>, vector<1x8x32xbf16>
    %1 = vector.shape_cast %0 : vector<1x8x32xbf16> to vector<8x32xbf16>
    %c0_2 = arith.constant 0 : index
    %c0_3 = arith.constant 0 : index
    %2 = vector.load %arg3[%c0_2, %c0_3] : memref<32x32xbf16, #tpu.memory_space<vmem>>, vector<32x32xbf16>
    %cst = arith.constant dense<0.000000e+00> : vector<8x32xf32>
    %3 = tpu.matmul %1, %2, %cst {dimension_numbers = #tpu.dot_dimension_numbers<[1], [0], [0], [1], [0, 0, 1, 1], [], []>} : vector<8x32xbf16>, vector<32x32xbf16>, vector<8x32xf32> -> vector<8x32xf32>
    %4 = arith.truncf %3 : vector<8x32xf32> to vector<8x32xbf16>
    %c0_4 = arith.constant 0 : index
    %c0_5 = arith.constant 0 : index
    %c0_6 = arith.constant 0 : index
    %5 = vector.load %arg6[%c0_4, %c0_5, %c0_6] : memref<1x8x32xbf16, #tpu.memory_space<vmem>>, vector<1x8x32xbf16>
    %6 = vector.shape_cast %5 : vector<1x8x32xbf16> to vector<8x32xbf16>
    %7 = vector.shape_cast %4 : vector<8x32xbf16> to vector<1x8x32xbf16>
    tpu.vector_store %arg6[%c0_4, %c0_5, %c0_6], %7 {strides = array<i32>} : memref<1x8x32xbf16, #tpu.memory_space<vmem>>, vector<1x8x32xbf16>,
    %c0_7 = arith.constant 0 : index
    %c0_8 = arith.constant 0 : index
    %8 = vector.load %arg4[%c0_7, %c0_8] : memref<32x32xbf16, #tpu.memory_space<vmem>>, vector<32x32xbf16>
    %cst_9 = arith.constant dense<0.000000e+00> : vector<8x32xf32>
    %9 = tpu.matmul %1, %8, %cst_9 {dimension_numbers = #tpu.dot_dimension_numbers<[1], [0], [0], [1], [0, 0, 1, 1], [], []>} : vector<8x32xbf16>, vector<32x32xbf16>, vector<8x32xf32> -> vector<8x32xf32>
    %10 = arith.truncf %9 : vector<8x32xf32> to vector<8x32xbf16>
    %c0_10 = arith.constant 0 : index
    %c0_11 = arith.constant 0 : index
    %c0_12 = arith.constant 0 : index
    %11 = vector.load %arg7[%c0_10, %c0_11, %c0_12] : memref<1x8x32xbf16, #tpu.memory_space<vmem>>, vector<1x8x32xbf16>
    %12 = vector.shape_cast %11 : vector<1x8x32xbf16> to vector<8x32xbf16>
    %13 = vector.shape_cast %10 : vector<8x32xbf16> to vector<1x8x32xbf16>
    tpu.vector_store %arg7[%c0_10, %c0_11, %c0_12], %13 {strides = array<i32>} : memref<1x8x32xbf16, #tpu.memory_space<vmem>>, vector<1x8x32xbf16>,
    %c0_13 = arith.constant 0 : index
    %c0_14 = arith.constant 0 : index
    %14 = vector.load %arg5[%c0_13, %c0_14] : memref<32x32xbf16, #tpu.memory_space<vmem>>, vector<32x32xbf16>
    %cst_15 = arith.constant dense<0.000000e+00> : vector<8x32xf32>
    %15 = tpu.matmul %1, %14, %cst_15 {dimension_numbers = #tpu.dot_dimension_numbers<[1], [0], [0], [1], [0, 0, 1, 1], [], []>} : vector<8x32xbf16>, vector<32x32xbf16>, vector<8x32xf32> -> vector<8x32xf32>
    %16 = arith.truncf %15 : vector<8x32xf32> to vector<8x32xbf16>
    %c0_16 = arith.constant 0 : index
    %c0_17 = arith.constant 0 : index
    %c0_18 = arith.constant 0 : index
    %17 = vector.load %arg8[%c0_16, %c0_17, %c0_18] : memref<1x8x32xbf16, #tpu.memory_space<vmem>>, vector<1x8x32xbf16>
    %18 = vector.shape_cast %17 : vector<1x8x32xbf16> to vector<8x32xbf16>
    %19 = vector.shape_cast %16 : vector<8x32xbf16> to vector<1x8x32xbf16>
    tpu.vector_store %arg8[%c0_16, %c0_17, %c0_18], %19 {strides = array<i32>} : memref<1x8x32xbf16, #tpu.memory_space<vmem>>, vector<1x8x32xbf16>,
    return
  }
  func.func @transform_0(%arg0: i32, %arg1: i32) -> (i32, i32, i32) {
    %c0_i32 = arith.constant 0 : i32
    %c0_i32_0 = arith.constant 0 : i32
    return %arg0, %arg1, %c0_i32 : i32, i32, i32
  }
  func.func @transform_1(%arg0: i32, %arg1: i32) -> (i32, i32) {
    %c0_i32 = arith.constant 0 : i32
    %c0_i32_0 = arith.constant 0 : i32
    %c0_i32_1 = arith.constant 0 : i32
    return %c0_i32, %c0_i32_0 : i32, i32
  }
  func.func @transform_2(%arg0: i32, %arg1: i32) -> (i32, i32) {
    %c0_i32 = arith.constant 0 : i32
    %c0_i32_0 = arith.constant 0 : i32
    %c0_i32_1 = arith.constant 0 : i32
    return %c0_i32, %c0_i32_0 : i32, i32
  }
  func.func @transform_3(%arg0: i32, %arg1: i32) -> (i32, i32) {
    %c0_i32 = arith.constant 0 : i32
    %c0_i32_0 = arith.constant 0 : i32
    %c0_i32_1 = arith.constant 0 : i32
    return %c0_i32, %c0_i32_0 : i32, i32
  }
  func.func @transform_4(%arg0: i32, %arg1: i32) -> (i32, i32, i32) {
    %c0_i32 = arith.constant 0 : i32
    %c0_i32_0 = arith.constant 0 : i32
    return %arg0, %arg1, %c0_i32 : i32, i32, i32
  }
  func.func @transform_5(%arg0: i32, %arg1: i32) -> (i32, i32, i32) {
    %c0_i32 = arith.constant 0 : i32
    %c0_i32_0 = arith.constant 0 : i32
    return %arg0, %arg1, %c0_i32 : i32, i32, i32
  }
  func.func @transform_6(%arg0: i32, %arg1: i32) -> (i32, i32, i32) {
    %c0_i32 = arith.constant 0 : i32
    %c0_i32_0 = arith.constant 0 : i32
    return %arg0, %arg1, %c0_i32 : i32, i32, i32
  }
}

module attributes {stable_mosaic.version = 11 : i64} {
  func.func @_qkv_proj_kernel(%arg0: i32, %arg1: i32, %arg2: memref<1x8x32xbf16, #tpu.memory_space<vmem>>, %arg3: memref<32x32xbf16, #tpu.memory_space<vmem>>, %arg4: memref<32x32xbf16, #tpu.memory_space<vmem>>, %arg5: memref<32x32xbf16, #tpu.memory_space<vmem>>, %arg6: memref<1x8x32xbf16, #tpu.memory_space<vmem>>, %arg7: memref<1x8x32xbf16, #tpu.memory_space<vmem>>, %arg8: memref<1x8x32xbf16, #tpu.memory_space<vmem>>) attributes {dimension_semantics = [#tpu.dimension_semantics<parallel>, #tpu.dimension_semantics<parallel>], iteration_bounds = array<i64: 2, 1>, scalar_prefetch = 0 : i64, scratch_operands = 0 : i64, tpu.core_type = #tpu.core_type<tc>, window_params = [{transform_indices = @transform_0, window_bounds = array<i64: 1, 8, 32>}, {pipeline_mode = #tpu.pipeline_mode<synchronous>, transform_indices = @transform_1, window_bounds = array<i64: 32, 32>}, {pipeline_mode = #tpu.pipeline_mode<synchronous>, transform_indices = @transform_2, window_bounds = array<i64: 32, 32>}, {pipeline_mode = #tpu.pipeline_mode<synchronous>, transform_indices = @transform_3, window_bounds = array<i64: 32, 32>}, {transform_indices = @transform_4, window_bounds = array<i64: 1, 8, 32>}, {transform_indices = @transform_5, window_bounds = array<i64: 1, 8, 32>}, {transform_indices = @transform_6, window_bounds = array<i64: 1, 8, 32>}]} {
    %c0 = arith.constant 0 : index
    %c0_0 = arith.constant 0 : index
    %c0_1 = arith.constant 0 : index
    %0 = vector.load %arg2[%c0, %c0_0, %c0_1] : memref<1x8x32xbf16, #tpu.memory_space<vmem>>, vector<1x8x32xbf16>
    %1 = vector.shape_cast %0 : vector<1x8x32xbf16> to vector<8x32xbf16>
    %c0_2 = arith.constant 0 : index
    %c0_3 = arith.constant 0 : index
    %2 = vector.load %arg3[%c0_2, %c0_3] : memref<32x32xbf16, #tpu.memory_space<vmem>>, vector<32x32xbf16>
    %cst = arith.constant dense<0.000000e+00> : vector<8x32xf32>
    %3 = tpu.matmul %1, %2, %cst {dimension_numbers = #tpu.dot_dimension_numbers<[1], [0], [0], [1], [0, 0, 1, 1], [], []>} : vector<8x32xbf16>, vector<32x32xbf16>, vector<8x32xf32> -> vector<8x32xf32>
    %4 = arith.truncf %3 : vector<8x32xf32> to vector<8x32xbf16>
    %c0_4 = arith.constant 0 : index
    %c0_5 = arith.constant 0 : index
    %c0_6 = arith.constant 0 : index
    %5 = vector.load %arg6[%c0_4, %c0_5, %c0_6] : memref<1x8x32xbf16, #tpu.memory_space<vmem>>, vector<1x8x32xbf16>
    %6 = vector.shape_cast %5 : vector<1x8x32xbf16> to vector<8x32xbf16>
    %7 = vector.shape_cast %4 : vector<8x32xbf16> to vector<1x8x32xbf16>
    tpu.vector_store %arg6[%c0_4, %c0_5, %c0_6], %7 {strides = array<i32>} : memref<1x8x32xbf16, #tpu.memory_space<vmem>>, vector<1x8x32xbf16>,
    %c0_7 = arith.constant 0 : index
    %c0_8 = arith.constant 0 : index
    %8 = vector.load %arg4[%c0_7, %c0_8] : memref<32x32xbf16, #tpu.memory_space<vmem>>, vector<32x32xbf16>
    %cst_9 = arith.constant dense<0.000000e+00> : vector<8x32xf32>
    %9 = tpu.matmul %1, %8, %cst_9 {dimension_numbers = #tpu.dot_dimension_numbers<[1], [0], [0], [1], [0, 0, 1, 1], [], []>} : vector<8x32xbf16>, vector<32x32xbf16>, vector<8x32xf32> -> vector<8x32xf32>
    %10 = arith.truncf %9 : vector<8x32xf32> to vector<8x32xbf16>
    %c0_10 = arith.constant 0 : index
    %c0_11 = arith.constant 0 : index
    %c0_12 = arith.constant 0 : index
    %11 = vector.load %arg7[%c0_10, %c0_11, %c0_12] : memref<1x8x32xbf16, #tpu.memory_space<vmem>>, vector<1x8x32xbf16>
    %12 = vector.shape_cast %11 : vector<1x8x32xbf16> to vector<8x32xbf16>
    %13 = vector.shape_cast %10 : vector<8x32xbf16> to vector<1x8x32xbf16>
    tpu.vector_store %arg7[%c0_10, %c0_11, %c0_12], %13 {strides = array<i32>} : memref<1x8x32xbf16, #tpu.memory_space<vmem>>, vector<1x8x32xbf16>,
    %c0_13 = arith.constant 0 : index
    %c0_14 = arith.constant 0 : index
    %14 = vector.load %arg5[%c0_13, %c0_14] : memref<32x32xbf16, #tpu.memory_space<vmem>>, vector<32x32xbf16>
    %cst_15 = arith.constant dense<0.000000e+00> : vector<8x32xf32>
    %15 = tpu.matmul %1, %14, %cst_15 {dimension_numbers = #tpu.dot_dimension_numbers<[1], [0], [0], [1], [0, 0, 1, 1], [], []>} : vector<8x32xbf16>, vector<32x32xbf16>, vector<8x32xf32> -> vector<8x32xf32>
    %16 = arith.truncf %15 : vector<8x32xf32> to vector<8x32xbf16>
    %c0_16 = arith.constant 0 : index
    %c0_17 = arith.constant 0 : index
    %c0_18 = arith.constant 0 : index
    %17 = vector.load %arg8[%c0_16, %c0_17, %c0_18] : memref<1x8x32xbf16, #tpu.memory_space<vmem>>, vector<1x8x32xbf16>
    %18 = vector.shape_cast %17 : vector<1x8x32xbf16> to vector<8x32xbf16>
    %19 = vector.shape_cast %16 : vector<8x32xbf16> to vector<1x8x32xbf16>
    tpu.vector_store %arg8[%c0_16, %c0_17, %c0_18], %19 {strides = array<i32>} : memref<1x8x32xbf16, #tpu.memory_space<vmem>>, vector<1x8x32xbf16>,
    return
  }
  func.func @transform_0(%arg0: i32, %arg1: i32) -> (i32, i32, i32) {
    %c0_i32 = arith.constant 0 : i32
    %c0_i32_0 = arith.constant 0 : i32
    return %arg0, %arg1, %c0_i32 : i32, i32, i32
  }
  func.func @transform_1(%arg0: i32, %arg1: i32) -> (i32, i32) {
    %c0_i32 = arith.constant 0 : i32
    %c0_i32_0 = arith.constant 0 : i32
    %c0_i32_1 = arith.constant 0 : i32
    return %c0_i32, %c0_i32_0 : i32, i32
  }
  func.func @transform_2(%arg0: i32, %arg1: i32) -> (i32, i32) {
    %c0_i32 = arith.constant 0 : i32
    %c0_i32_0 = arith.constant 0 : i32
    %c0_i32_1 = arith.constant 0 : i32
    return %c0_i32, %c0_i32_0 : i32, i32
  }
  func.func @transform_3(%arg0: i32, %arg1: i32) -> (i32, i32) {
    %c0_i32 = arith.constant 0 : i32
    %c0_i32_0 = arith.constant 0 : i32
    %c0_i32_1 = arith.constant 0 : i32
    return %c0_i32, %c0_i32_0 : i32, i32
  }
  func.func @transform_4(%arg0: i32, %arg1: i32) -> (i32, i32, i32) {
    %c0_i32 = arith.constant 0 : i32
    %c0_i32_0 = arith.constant 0 : i32
    return %arg0, %arg1, %c0_i32 : i32, i32, i32
  }
  func.func @transform_5(%arg0: i32, %arg1: i32) -> (i32, i32, i32) {
    %c0_i32 = arith.constant 0 : i32
    %c0_i32_0 = arith.constant 0 : i32
    return %arg0, %arg1, %c0_i32 : i32, i32, i32
  }
  func.func @transform_6(%arg0: i32, %arg1: i32) -> (i32, i32, i32) {
    %c0_i32 = arith.constant 0 : i32
    %c0_i32_0 = arith.constant 0 : i32
    return %arg0, %arg1, %c0_i32 : i32, i32, i32
  }
}

</mosaic_0001>

<llo_original>
// kernel: tpu_custom_call.1
$region0: #{tpu_custom_call.1}
  #allocation0 [shape = 'u32[]', space=smem, size = 0x4, offset = 0x4, fixed_abs, tag = 'smem constant byte address 0x4 - core index']
  #allocation1 [shape = 'u32[72,128]{1,0:T(1,128)}', space=vmem, size = 0x9000, scoped, tag = 'internal scratch']
  %s0 = inlined_call_operand.hbm [shape: bf16[2,8,32], index: 0, kind: input, shape index: {}]
  %s1 = inlined_call_operand.hbm [shape: bf16[32,32], index: 1, kind: input, shape index: {}]
  %s2 = inlined_call_operand.hbm [shape: bf16[32,32], index: 2, kind: input, shape index: {}]
  %s3 = inlined_call_operand.hbm [shape: bf16[32,32], index: 3, kind: input, shape index: {}]
  %s4 = inlined_call_operand.hbm [shape: bf16[2,8,32], index: 4, kind: output, shape index: {0}]
  %s5 = inlined_call_operand.hbm [shape: bf16[2,8,32], index: 5, kind: output, shape index: {1}]
  %s6 = inlined_call_operand.hbm [shape: bf16[2,8,32], index: 6, kind: output, shape index: {2}]
  %7 = xla_tuple %s4, %s5, %s6
  %s8 = sld [smem:[#allocation0]]
  $region81: #{tpu_custom_call.1} parent=0
    _
  %s10 = ssub.s32 1, %s8
  %s11 = scalar_select 0, %s10, %s8
  $region1: #{tpu_custom_call.1} parent=0
    #allocation2 [shape = 'u8[4096]{0}', space=vmem, size = 0x1000, scoped, tag = 'input window, operand 0']
    #allocation3 [shape = 's32[2]{0}', space=sflag, size = 0x8, scoped, tag = 'scoped memory for tpu_custom_call.1']
    #allocation4 [shape = 's32[2]{0}', space=sflag, size = 0x8, scoped, tag = 'scoped memory for tpu_custom_call.1']
    #allocation5 [shape = 'u8[8192]{0}', space=vmem, size = 0x2000, scoped, tag = 'input window, operand 1, single buffered']
    #allocation6 [shape = 's32[1]{0}', space=sflag, size = 0x4, scoped, tag = 'scoped memory for tpu_custom_call.1']
    #allocation7 [shape = 'u8[8192]{0}', space=vmem, size = 0x2000, scoped, tag = 'input window, operand 2, single buffered']
    #allocation8 [shape = 'u8[8192]{0}', space=vmem, size = 0x2000, scoped, tag = 'input window, operand 3, single buffered']
    #allocation9 [shape = 's32[1]{0}', space=sflag, size = 0x4, scoped, tag = 'scoped memory for tpu_custom_call.1']
    #allocation10 [shape = 'u8[4096]{0}', space=vmem, size = 0x1000, scoped, tag = 'output window, operand 0']
    #allocation11 [shape = 'u8[4096]{0}', space=vmem, size = 0x1000, scoped, tag = 'output window, operand 1']
    #allocation12 [shape = 's32[2]{0}', space=sflag, size = 0x8, scoped, tag = 'scoped memory for tpu_custom_call.1']
    #allocation13 [shape = 'u8[4096]{0}', space=vmem, size = 0x1000, scoped, tag = 'output window, operand 2']
    %12 = vsyncpa [#allocation3], 0
    %s13 = scalar_lea.sflag [#allocation3], 1
    %14 = vsyncpa %s13, 0
    %15 = vsyncpa [#allocation6], 0
    %16 = vsyncpa [#allocation9], 0
    %17 = vsyncpa [#allocation4], 0
    %s18 = scalar_lea.sflag [#allocation4], 1
    %19 = vsyncpa %s18, 0
    %20 = vsyncpa [#allocation12], 0
    %s21 = scalar_lea.sflag [#allocation12], 1
    %22 = vsyncpa %s21, 0
    loop: start=0, step=1, limit=4
    $region2: #{tpu_custom_call.1} parent=1 // loop_pre_header
      _
    $region3: #{tpu_custom_call.1} parent=1 // loop_header
      %s24 = sphi 0, %s28
      %p25 = scmp.ge.s32.totalorder %s24, 4
      %s31 = sphi 0, %s43
      %s32 = sphi 0, %s39
      %s33 = sphi 0, %s31
      %s34 = sphi 0, %s32
      %s35 = sphi 0, %s33
      %s36 = sphi 0, %s34
      %s48 = sphi 0, %s50
      %s51 = sphi 0, %s48
      %s52 = sphi 0, %s51
      %s68 = sphi 0, %s52
      %s72 = sphi 0, %s72
      %s74 = sphi 0, %s72
      %s75 = sphi 0, %s74
      %s89 = sphi 0, %s75
      %s93 = sphi 0, %s93
      %s95 = sphi 0, %s93
      %s96 = sphi 0, %s95
      %s110 = sphi 0, %s96
      %s114 = sphi 0, %s114
      %s116 = sphi 0, %s114
      %s117 = sphi 0, %s116
      %s131 = sphi 0, %s117
      %s139 = sphi 0, %s141
      %s142 = sphi 0, %s139
      %s143 = sphi 0, %s142
      %s159 = sphi 0, %s143
      %s167 = sphi 0, %s169
      %s170 = sphi 0, %s167
      %s171 = sphi 0, %s170
      %s187 = sphi 0, %s171
      %s195 = sphi 0, %s197
      %s198 = sphi 0, %s195
      %s199 = sphi 0, %s198
      %s215 = sphi 0, %s199
    $region4: #{tpu_custom_call.1} parent=1 // loop_header_branch
      %27 = sbr.rel (%p25) target = $region8
    $region5: #{tpu_custom_call.1} parent=1 // loop_body
      %s29 = ssub.s32 %s24, 1
      %s30 = ssub.s32 %s24, 2
      %s37 = sadd.s32 1, %s32
      %p38 = scmp.ge.s32.totalorder %s37, 1
      %s39 = scalar_select %p38, 0, %s37
      %s40 = sadd.s32 1, %s31
      %s41 = scalar_select %p38, %s40, %s31
      %p42 = scmp.ge.s32.totalorder %s41, 2
      %s43 = scalar_select %p42, 0, %s41
      %s44 = ssub.s32 %s31, %s43
      %s45 = ssub.s32 %s32, %s39
      %s46 = sor.u32 %s44, %s45
      %p47 = scmp.eq.s32.totalorder %s46, 0
      %s49 = sadd.s32 %s48, 1
      %s50 = scalar_select %p47, %s48, %s49
      %p53 = pneg %p47
      %p54 = scmp.eq.s32.totalorder %s24, 1
      %p55 = por %p53, %p54
      %p56 = scmp.ne.s32.totalorder %s48, %s51
      %p57 = scmp.eq.s32.totalorder %s24, 0
      %p58 = por %p56, %p57
      %p59 = scmp.ne.s32.totalorder %s48, %s51
      %p60 = scmp.eq.s32.totalorder %s29, 1
      %p61 = por %p59, %p60
      %p62 = scmp.ne.s32.totalorder %s51, %s52
      %p63 = scmp.eq.s32.totalorder %s29, 0
      %p64 = por %p62, %p63
      %p65 = scmp.ne.s32.totalorder %s51, %s52
      %p66 = scmp.eq.s32.totalorder %s30, 1
      %p67 = por %p65, %p66
      %p69 = scmp.ne.s32.totalorder %s52, %s68
      %p70 = scmp.eq.s32.totalorder %s30, 0
      %p71 = por %p69, %p70
      %s73 = sadd.s32 %s72, 1
      %p76 = scmp.eq.s32.totalorder %s24, 1
      %p77 = scmp.ne.s32.totalorder %s72, %s74
      %p78 = scmp.eq.s32.totalorder %s24, 0
      %p79 = por %p77, %p78
      %p80 = scmp.ne.s32.totalorder %s72, %s74
      %p81 = scmp.eq.s32.totalorder %s29, 1
      %p82 = por %p80, %p81
      %p83 = scmp.ne.s32.totalorder %s74, %s75
      %p84 = scmp.eq.s32.totalorder %s29, 0
      %p85 = por %p83, %p84
      %p86 = scmp.ne.s32.totalorder %s74, %s75
      %p87 = scmp.eq.s32.totalorder %s30, 1
      %p88 = por %p86, %p87
      %p90 = scmp.ne.s32.totalorder %s75, %s89
      %p91 = scmp.eq.s32.totalorder %s30, 0
      %p92 = por %p90, %p91
      %s94 = sadd.s32 %s93, 1
      %p97 = scmp.eq.s32.totalorder %s24, 1
      %p98 = scmp.ne.s32.totalorder %s93, %s95
      %p99 = scmp.eq.s32.totalorder %s24, 0
      %p100 = por %p98, %p99
      %p101 = scmp.ne.s32.totalorder %s93, %s95
      %p102 = scmp.eq.s32.totalorder %s29, 1
      %p103 = por %p101, %p102
      %p104 = scmp.ne.s32.totalorder %s95, %s96
      %p105 = scmp.eq.s32.totalorder %s29, 0
      %p106 = por %p104, %p105
      %p107 = scmp.ne.s32.totalorder %s95, %s96
      %p108 = scmp.eq.s32.totalorder %s30, 1
      %p109 = por %p107, %p108
      %p111 = scmp.ne.s32.totalorder %s96, %s110
      %p112 = scmp.eq.s32.totalorder %s30, 0
      %p113 = por %p111, %p112
      %s115 = sadd.s32 %s114, 1
      %p118 = scmp.eq.s32.totalorder %s24, 1
      %p119 = scmp.ne.s32.totalorder %s114, %s116
      %p120 = scmp.eq.s32.totalorder %s24, 0
      %p121 = por %p119, %p120
      %p122 = scmp.ne.s32.totalorder %s114, %s116
      %p123 = scmp.eq.s32.totalorder %s29, 1
      %p124 = por %p122, %p123
      %p125 = scmp.ne.s32.totalorder %s116, %s117
      %p126 = scmp.eq.s32.totalorder %s29, 0
      %p127 = por %p125, %p126
      %p128 = scmp.ne.s32.totalorder %s116, %s117
      %p129 = scmp.eq.s32.totalorder %s30, 1
      %p130 = por %p128, %p129
      %p132 = scmp.ne.s32.totalorder %s117, %s131
      %p133 = scmp.eq.s32.totalorder %s30, 0
      %p134 = por %p132, %p133
      %s135 = ssub.s32 %s31, %s43
      %s136 = ssub.s32 %s32, %s39
      %s137 = sor.u32 %s135, %s136
      %p138 = scmp.eq.s32.totalorder %s137, 0
      %s140 = sadd.s32 %s139, 1
      %s141 = scalar_select %p138, %s139, %s140
      %p144 = pneg %p138
      %p145 = scmp.eq.s32.totalorder %s24, 1
      %p146 = por %p144, %p145
      %p147 = scmp.ne.s32.totalorder %s139, %s142
      %p148 = scmp.eq.s32.totalorder %s24, 0
      %p149 = por %p147, %p148
      %p150 = scmp.ne.s32.totalorder %s139, %s142
      %p151 = scmp.eq.s32.totalorder %s29, 1
      %p152 = por %p150, %p151
      %p153 = scmp.ne.s32.totalorder %s142, %s143
      %p154 = scmp.eq.s32.totalorder %s29, 0
      %p155 = por %p153, %p154
      %p156 = scmp.ne.s32.totalorder %s142, %s143
      %p157 = scmp.eq.s32.totalorder %s30, 1
      %p158 = por %p156, %p157
      %p160 = scmp.ne.s32.totalorder %s143, %s159
      %p161 = scmp.eq.s32.totalorder %s30, 0
      %p162 = por %p160, %p161
      %s163 = ssub.s32 %s31, %s43
      %s164 = ssub.s32 %s32, %s39
      %s165 = sor.u32 %s163, %s164
      %p166 = scmp.eq.s32.totalorder %s165, 0
      %s168 = sadd.s32 %s167, 1
      %s169 = scalar_select %p166, %s167, %s168
      %p172 = pneg %p166
      %p173 = scmp.eq.s32.totalorder %s24, 1
      %p174 = por %p172, %p173
      %p175 = scmp.ne.s32.totalorder %s167, %s170
      %p176 = scmp.eq.s32.totalorder %s24, 0
      %p177 = por %p175, %p176
      %p178 = scmp.ne.s32.totalorder %s167, %s170
      %p179 = scmp.eq.s32.totalorder %s29, 1
      %p180 = por %p178, %p179
      %p181 = scmp.ne.s32.totalorder %s170, %s171
      %p182 = scmp.eq.s32.totalorder %s29, 0
      %p183 = por %p181, %p182
      %p184 = scmp.ne.s32.totalorder %s170, %s171
      %p185 = scmp.eq.s32.totalorder %s30, 1
      %p186 = por %p184, %p185
      %p188 = scmp.ne.s32.totalorder %s171, %s187
      %p189 = scmp.eq.s32.totalorder %s30, 0
      %p190 = por %p188, %p189
      %s191 = ssub.s32 %s31, %s43
      %s192 = ssub.s32 %s32, %s39
      %s193 = sor.u32 %s191, %s192
      %p194 = scmp.eq.s32.totalorder %s193, 0
      %s196 = sadd.s32 %s195, 1
      %s197 = scalar_select %p194, %s195, %s196
      %p200 = pneg %p194
      %p201 = scmp.eq.s32.totalorder %s24, 1
      %p202 = por %p200, %p201
      %p203 = scmp.ne.s32.totalorder %s195, %s198
      %p204 = scmp.eq.s32.totalorder %s24, 0
      %p205 = por %p203, %p204
      %p206 = scmp.ne.s32.totalorder %s195, %s198
      %p207 = scmp.eq.s32.totalorder %s29, 1
      %p208 = por %p206, %p207
      %p209 = scmp.ne.s32.totalorder %s198, %s199
      %p210 = scmp.eq.s32.totalorder %s29, 0
      %p211 = por %p209, %p210
      %p212 = scmp.ne.s32.totalorder %s198, %s199
      %p213 = scmp.eq.s32.totalorder %s30, 1
      %p214 = por %p212, %p213
      %p216 = scmp.ne.s32.totalorder %s199, %s215
      %p217 = scmp.eq.s32.totalorder %s30, 0
      %p218 = por %p216, %p217
      %p219 = scmp.le.s32.totalorder 1, %s24
      %p220 = scmp.lt.s32.totalorder %s24, 3
      %p221 = pnand %p219, %p220
      %p222 = pneg %p221
      // Predicated region
      $region9: #{tpu_custom_call.1} parent=5 // pred_check
        _
      $region10: #{tpu_custom_call.1} parent=5 // pred_check_branch
        %224 = sbr.rel (%p221) target = $region12
      $region11: #{tpu_custom_call.1} parent=5 // pred_region
        %s225 = ssub.s32 %s24, 1
        // Predicated region
        $region13: #{tpu_custom_call.1} parent=11 // pred_check
          %p226 = pneg %p85
        $region14: #{tpu_custom_call.1} parent=11 // pred_check_branch
          %228 = sbr.rel (%p226) target = $region16
        $region15: #{tpu_custom_call.1} parent=11 // pred_region
          %230 = vsyncadd [#allocation6], 0
          %s231 = sshll.u32 %s1, 4
          %s232 = int_to_ptr.hbm [resolvable:$true] %s231
          %s233 = sshll.u32 [#allocation5], 4
          %s234 = int_to_ptr.vmem [resolvable:$true] %s233
          %239 = dma.hbm_to_vmem [thread:$0]  %s232, 256, %s234, [#allocation6], 64, 64, 4
        $region16: #{tpu_custom_call.1} parent=11 // pred_fallthru
          _
        // Predicated region
        $region17: #{tpu_custom_call.1} parent=11 // pred_check
          %p240 = pneg %p106
        $region18: #{tpu_custom_call.1} parent=11 // pred_check_branch
          %242 = sbr.rel (%p240) target = $region20
        $region19: #{tpu_custom_call.1} parent=11 // pred_region
          %244 = vsyncadd [#allocation6], 0
          %s245 = sshll.u32 %s2, 4
          %s246 = int_to_ptr.hbm [resolvable:$true] %s245
          %s247 = sshll.u32 [#allocation7], 4
          %s248 = int_to_ptr.vmem [resolvable:$true] %s247
          %253 = dma.hbm_to_vmem [thread:$0]  %s246, 256, %s248, [#allocation6], 64, 64, 4
        $region20: #{tpu_custom_call.1} parent=11 // pred_fallthru
          _
        // Predicated region
        $region21: #{tpu_custom_call.1} parent=11 // pred_check
          %p254 = pneg %p127
        $region22: #{tpu_custom_call.1} parent=11 // pred_check_branch
          %256 = sbr.rel (%p254) target = $region24
        $region23: #{tpu_custom_call.1} parent=11 // pred_region
          %258 = vsyncadd [#allocation9], 0
          %s259 = sshll.u32 %s3, 4
          %s260 = int_to_ptr.hbm [resolvable:$true] %s259
          %s261 = sshll.u32 [#allocation8], 4
          %s262 = int_to_ptr.vmem [resolvable:$true] %s261
          %267 = dma.hbm_to_vmem [thread:$0]  %s260, 256, %s262, [#allocation9], 64, 64, 4
        $region24: #{tpu_custom_call.1} parent=11 // pred_fallthru
          _
      $region12: #{tpu_custom_call.1} parent=5 // pred_fallthru
        _
      %p268 = scmp.lt.s32.totalorder %s24, 2
      // Predicated region
      $region25: #{tpu_custom_call.1} parent=5 // pred_check
        %p269 = pneg %p268
      $region26: #{tpu_custom_call.1} parent=5 // pred_check_branch
        %271 = sbr.rel (%p269) target = $region28
      $region27: #{tpu_custom_call.1} parent=5 // pred_region
        // Predicated region
        $region29: #{tpu_custom_call.1} parent=27 // pred_check
          %p272 = pneg %p58
        $region30: #{tpu_custom_call.1} parent=27 // pred_check_branch
          %274 = sbr.rel (%p272) target = $region32
        $region31: #{tpu_custom_call.1} parent=27 // pred_region
          %s275 = sand.u32 %s48, 1
          %s276 = scalar_lea.sflag [#allocation3], %s275
          %s277 = sand.u32 %s48, 1
          %s278 = smul.addr %s277, 4
          %s279 = scalar_lea.vmem [#allocation2], %s278
          %281 = vsyncadd %s276, 0
          %s282 = sadd.s32 %s32, %s31
          %s283 = smul.addr %s282, 4
          %s284 = scalar_lea.hbm %s0, %s283
          %s286 = sshll.u32 %s284, 4
          %s287 = int_to_ptr.hbm [resolvable:$true] %s286
          %s288 = sshll.u32 %s279, 4
          %s289 = int_to_ptr.vmem [resolvable:$true] %s288
          %291 = dma.hbm_to_vmem [thread:$0]  %s287, 64, %s289, %s276
        $region32: #{tpu_custom_call.1} parent=27 // pred_fallthru
          _
      $region28: #{tpu_custom_call.1} parent=5 // pred_fallthru
        _
      %p292 = scmp.le.s32.totalorder 1, %s24
      %p293 = scmp.lt.s32.totalorder %s24, 3
      %p294 = pnand %p292, %p293
      %p295 = pneg %p294
      // Predicated region
      $region33: #{tpu_custom_call.1} parent=5 // pred_check
        _
      $region34: #{tpu_custom_call.1} parent=5 // pred_check_branch
        %297 = sbr.rel (%p294) target = $region36
      $region35: #{tpu_custom_call.1} parent=5 // pred_region
        %s298 = ssub.s32 %s24, 1
        %s299 = sand.u32 %s51, 1
        %s300 = scalar_lea.sflag [#allocation3], %s299
        %s301 = sand.u32 %s51, 1
        %s302 = smul.addr %s301, 4
        %s303 = scalar_lea.vmem [#allocation2], %s302
        // Predicated region
        $region37: #{tpu_custom_call.1} parent=35 // pred_check
          %p304 = pneg %p64
        $region38: #{tpu_custom_call.1} parent=35 // pred_check_branch
          %306 = sbr.rel (%p304) target = $region40
        $region39: #{tpu_custom_call.1} parent=35 // pred_region
          %308 = dma.done %s300, 64
        $region40: #{tpu_custom_call.1} parent=35 // pred_fallthru
          _
        // Predicated region
        $region41: #{tpu_custom_call.1} parent=35 // pred_check
          %p309 = pneg %p85
        $region42: #{tpu_custom_call.1} parent=35 // pred_check_branch
          %311 = sbr.rel (%p309) target = $region44
        $region43: #{tpu_custom_call.1} parent=35 // pred_region
          %313 = dma.done [#allocation6], 256
        $region44: #{tpu_custom_call.1} parent=35 // pred_fallthru
          _
        // Predicated region
        $region45: #{tpu_custom_call.1} parent=35 // pred_check
          %p314 = pneg %p106
        $region46: #{tpu_custom_call.1} parent=35 // pred_check_branch
          %316 = sbr.rel (%p314) target = $region48
        $region47: #{tpu_custom_call.1} parent=35 // pred_region
          %318 = dma.done [#allocation6], 256
        $region48: #{tpu_custom_call.1} parent=35 // pred_fallthru
          _
        // Predicated region
        $region49: #{tpu_custom_call.1} parent=35 // pred_check
          %p319 = pneg %p127
        $region50: #{tpu_custom_call.1} parent=35 // pred_check_branch
          %321 = sbr.rel (%p319) target = $region52
        $region51: #{tpu_custom_call.1} parent=35 // pred_region
          %323 = dma.done [#allocation9], 256
        $region52: #{tpu_custom_call.1} parent=35 // pred_fallthru
          _
        %s324 = sand.u32 %s51, 1
        %s325 = scalar_lea.sflag [#allocation3], %s324
        %s326 = sand.u32 %s51, 1
        %s327 = smul.addr %s326, 4
        %s328 = scalar_lea.vmem [#allocation2], %s327
        %p329 = pneg %p64
        %p330 = pneg %p61
        %p331 = pneg %p85
        %p332 = pneg %p82
        %p333 = pneg %p106
        %p334 = pneg %p103
        %p335 = pneg %p127
        %p336 = pneg %p124
        %p337 = pneg %p155
        %p338 = pneg %p152
        %s339 = sand.u32 %s142, 1
        %s340 = scalar_lea.sflag [#allocation4], %s339
        %s341 = sand.u32 %s142, 1
        %s342 = smul.addr %s341, 4
        %s343 = scalar_lea.vmem [#allocation10], %s342
        %p344 = pneg %p183
        %p345 = pneg %p180
        %s346 = sand.u32 %s29, 1
        %s347 = scalar_lea.sflag [#allocation12], %s346
        %s348 = sand.u32 %s170, 1
        %s349 = smul.addr %s348, 4
        %s350 = scalar_lea.vmem [#allocation11], %s349
        %p351 = pneg %p211
        %p352 = pneg %p208
        %s353 = sand.u32 %s29, 1
        %s354 = scalar_lea.sflag [#allocation12], %s353
        %s355 = sand.u32 %s198, 1
        %s356 = smul.addr %s355, 4
        %s357 = scalar_lea.vmem [#allocation13], %s356
        %v359 = vld [vmem:[%s303] sm:$0xf]
        %v360 = vld [vmem:[#allocation5] sm:$0xf]
        %v361 = vld [vmem:[#allocation5 + $0x4] sm:$0xf]
        %v362 = vld [vmem:[#allocation5 + $0x8] sm:$0xf]
        %v363 = vld [vmem:[#allocation5 + $0xc] sm:$0xf]
        %v368 = vunpack.c.l.b16 %v360
        %v369 = vunpack.c.l.b16 %v361
        %v370 = vunpack.c.l.b16 %v362
        %v371 = vunpack.c.l.b16 %v363
        %v372 = vpack.c.b16 %v369, %v368
        %v373 = vpack.c.b16 %v371, %v370
        %vm376 = vcmask 261120
        %v378 = vsel %vm376, %v359, 0
        %380 = vmatpush.bf16.msra.mxu0 0
        %381 = vmatpush.bf16.msra.mxu0 0
        %382 = vmatpush.bf16.msra.mxu0 0
        %383 = vmatpush.bf16.msra.mxu0 0
        %384 = vmatpush.bf16.msra.mxu0 0
        %385 = vmatpush.bf16.msra.mxu0 0
        %386 = vmatpush.bf16.msra.mxu0 %v373
        %387 = vmatpush.bf16.msra.mxu0 %v372
        %388 = vmatmul.bf16.gmra.mxu0 %v378
        %v389 = vpop.f32.mrf.mxu0
        %v390 = vadd.f32 0.0, %v389
        %v391 = vpop.f32.mrf.mxu0
        %392 = vdwg.mxu0
        %v393 = vpack.c.bf16 %v390, %v390
        %vm394 = vcmask 257024
        %395 = vst.msk [vmem:[%s343] sm:$0xf] %vm394, %v393
        %v396 = vld [vmem:[#allocation7] sm:$0xf]
        %v397 = vld [vmem:[#allocation7 + $0x4] sm:$0xf]
        %v398 = vld [vmem:[#allocation7 + $0x8] sm:$0xf]
        %v399 = vld [vmem:[#allocation7 + $0xc] sm:$0xf]
        %v404 = vunpack.c.l.b16 %v396
        %v405 = vunpack.c.l.b16 %v397
        %v406 = vunpack.c.l.b16 %v398
        %v407 = vunpack.c.l.b16 %v399
        %v408 = vpack.c.b16 %v405, %v404
        %v409 = vpack.c.b16 %v407, %v406
        %412 = vmatpush.bf16.msra.mxu0 0
        %413 = vmatpush.bf16.msra.mxu0 0
        %414 = vmatpush.bf16.msra.mxu0 0
        %415 = vmatpush.bf16.msra.mxu0 0
        %416 = vmatpush.bf16.msra.mxu0 0
        %417 = vmatpush.bf16.msra.mxu0 0
        %418 = vmatpush.bf16.msra.mxu0 %v409
        %419 = vmatpush.bf16.msra.mxu0 %v408
        %420 = vmatmul.bf16.gmra.mxu0 %v378
        %v421 = vpop.f32.mrf.mxu0
        %v422 = vadd.f32 0.0, %v421
        %v423 = vpop.f32.mrf.mxu0
        %424 = vdwg.mxu0
        %v425 = vpack.c.bf16 %v422, %v422
        %426 = vst.msk [vmem:[%s350] sm:$0xf] %vm394, %v425
        %v427 = vld [vmem:[#allocation8] sm:$0xf]
        %v428 = vld [vmem:[#allocation8 + $0x4] sm:$0xf]
        %v429 = vld [vmem:[#allocation8 + $0x8] sm:$0xf]
        %v430 = vld [vmem:[#allocation8 + $0xc] sm:$0xf]
        %v435 = vunpack.c.l.b16 %v427
        %v436 = vunpack.c.l.b16 %v428
        %v437 = vunpack.c.l.b16 %v429
        %v438 = vunpack.c.l.b16 %v430
        %v439 = vpack.c.b16 %v436, %v435
        %v440 = vpack.c.b16 %v438, %v437
        %443 = vmatpush.bf16.msra.mxu0 0
        %444 = vmatpush.bf16.msra.mxu0 0
        %445 = vmatpush.bf16.msra.mxu0 0
        %446 = vmatpush.bf16.msra.mxu0 0
        %447 = vmatpush.bf16.msra.mxu0 0
        %448 = vmatpush.bf16.msra.mxu0 0
        %449 = vmatpush.bf16.msra.mxu0 %v440
        %450 = vmatpush.bf16.msra.mxu0 %v439
        %451 = vmatmul.bf16.gmra.mxu0 %v378
        %v452 = vpop.f32.mrf.mxu0
        %v453 = vadd.f32 0.0, %v452
        %v454 = vpop.f32.mrf.mxu0
        %455 = vdwg.mxu0
        %v456 = vpack.c.bf16 %v453, %v453
        %457 = vst.msk [vmem:[%s357] sm:$0xf] %vm394, %v456
        %s458 = sand.u32 %s142, 1
        %s459 = scalar_lea.sflag [#allocation4], %s458
        %s460 = sand.u32 %s142, 1
        %s461 = smul.addr %s460, 4
        %s462 = scalar_lea.vmem [#allocation10], %s461
        %s463 = sand.u32 %s29, 1
        %s464 = scalar_lea.sflag [#allocation12], %s463
        %s465 = sand.u32 %s170, 1
        %s466 = smul.addr %s465, 4
        %s467 = scalar_lea.vmem [#allocation11], %s466
        %s468 = sand.u32 %s29, 1
        %s469 = scalar_lea.sflag [#allocation12], %s468
        %s470 = sand.u32 %s198, 1
        %s471 = smul.addr %s470, 4
        %s472 = scalar_lea.vmem [#allocation13], %s471
        // Predicated region
        $region53: #{tpu_custom_call.1} parent=35 // pred_check
          %p473 = pneg %p152
        $region54: #{tpu_custom_call.1} parent=35 // pred_check_branch
          %475 = sbr.rel (%p473) target = $region56
        $region55: #{tpu_custom_call.1} parent=35 // pred_region
          %477 = vsyncadd %s459, 0
          %s478 = sadd.s32 %s34, %s33
          %s479 = smul.addr %s478, 4
          %s480 = scalar_lea.hbm %s4, %s479
          %s482 = sshll.u32 %s462, 4
          %s483 = int_to_ptr.vmem [resolvable:$true] %s482
          %s484 = sshll.u32 %s480, 4
          %s485 = int_to_ptr.hbm [resolvable:$true] %s484
          %487 = dma.vmem_to_hbm [thread:$0]  %s483, 64, %s485, %s459
        $region56: #{tpu_custom_call.1} parent=35 // pred_fallthru
          _
        // Predicated region
        $region57: #{tpu_custom_call.1} parent=35 // pred_check
          %p488 = pneg %p180
        $region58: #{tpu_custom_call.1} parent=35 // pred_check_branch
          %490 = sbr.rel (%p488) target = $region60
        $region59: #{tpu_custom_call.1} parent=35 // pred_region
          %492 = vsyncadd %s464, 0
          %s493 = sadd.s32 %s34, %s33
          %s494 = smul.addr %s493, 4
          %s495 = scalar_lea.hbm %s5, %s494
          %s497 = sshll.u32 %s467, 4
          %s498 = int_to_ptr.vmem [resolvable:$true] %s497
          %s499 = sshll.u32 %s495, 4
          %s500 = int_to_ptr.hbm [resolvable:$true] %s499
          %502 = dma.vmem_to_hbm [thread:$0]  %s498, 64, %s500, %s464
        $region60: #{tpu_custom_call.1} parent=35 // pred_fallthru
          _
        // Predicated region
        $region61: #{tpu_custom_call.1} parent=35 // pred_check
          %p503 = pneg %p208
        $region62: #{tpu_custom_call.1} parent=35 // pred_check_branch
          %505 = sbr.rel (%p503) target = $region64
        $region63: #{tpu_custom_call.1} parent=35 // pred_region
          %507 = vsyncadd %s469, 0
          %s508 = sadd.s32 %s34, %s33
          %s509 = smul.addr %s508, 4
          %s510 = scalar_lea.hbm %s6, %s509
          %s512 = sshll.u32 %s472, 4
          %s513 = int_to_ptr.vmem [resolvable:$true] %s512
          %s514 = sshll.u32 %s510, 4
          %s515 = int_to_ptr.hbm [resolvable:$true] %s514
          %517 = dma.vmem_to_hbm [thread:$0]  %s513, 64, %s515, %s469
        $region64: #{tpu_custom_call.1} parent=35 // pred_fallthru
          _
      $region36: #{tpu_custom_call.1} parent=5 // pred_fallthru
        _
      %p518 = scmp.le.s32.totalorder 2, %s24
      // Predicated region
      $region65: #{tpu_custom_call.1} parent=5 // pred_check
        %p519 = pneg %p518
      $region66: #{tpu_custom_call.1} parent=5 // pred_check_branch
        %521 = sbr.rel (%p519) target = $region68
      $region67: #{tpu_custom_call.1} parent=5 // pred_region
        %s522 = ssub.s32 %s24, 2
        // Predicated region
        $region69: #{tpu_custom_call.1} parent=67 // pred_check
          %p523 = pneg %p158
        $region70: #{tpu_custom_call.1} parent=67 // pred_check_branch
          %525 = sbr.rel (%p523) target = $region72
        $region71: #{tpu_custom_call.1} parent=67 // pred_region
          %s526 = sand.u32 %s143, 1
          %s527 = scalar_lea.sflag [#allocation4], %s526
          %s528 = sand.u32 %s143, 1
          %s529 = smul.addr %s528, 4
          %s530 = scalar_lea.vmem [#allocation10], %s529
          %532 = dma.done %s527, 64
        $region72: #{tpu_custom_call.1} parent=67 // pred_fallthru
          _
        // Predicated region
        $region73: #{tpu_custom_call.1} parent=67 // pred_check
          %p533 = pneg %p186
        $region74: #{tpu_custom_call.1} parent=67 // pred_check_branch
          %535 = sbr.rel (%p533) target = $region76
        $region75: #{tpu_custom_call.1} parent=67 // pred_region
          %s536 = sand.u32 %s30, 1
          %s537 = scalar_lea.sflag [#allocation12], %s536
          %s538 = sand.u32 %s171, 1
          %s539 = smul.addr %s538, 4
          %s540 = scalar_lea.vmem [#allocation11], %s539
          %542 = dma.done %s537, 64
        $region76: #{tpu_custom_call.1} parent=67 // pred_fallthru
          _
        // Predicated region
        $region77: #{tpu_custom_call.1} parent=67 // pred_check
          %p543 = pneg %p214
        $region78: #{tpu_custom_call.1} parent=67 // pred_check_branch
          %545 = sbr.rel (%p543) target = $region80
        $region79: #{tpu_custom_call.1} parent=67 // pred_region
          %s546 = sand.u32 %s30, 1
          %s547 = scalar_lea.sflag [#allocation12], %s546
          %s548 = sand.u32 %s199, 1
          %s549 = smul.addr %s548, 4
          %s550 = scalar_lea.vmem [#allocation13], %s549
          %552 = dma.done %s547, 64
        $region80: #{tpu_custom_call.1} parent=67 // pred_fallthru
          _
      $region68: #{tpu_custom_call.1} parent=5 // pred_fallthru
        _
    $region6: #{tpu_custom_call.1} parent=1 // loop_footer
      %s28 = sadd.s32 1, %s24
    $region7: #{tpu_custom_call.1} parent=1 // loop_footer_branch
      %23 = sbr.rel target = $region3
    $region8: #{tpu_custom_call.1} parent=1 // loop_exit
      _
    %553 = vsyncpa [#allocation3], 1
    %s554 = scalar_lea.sflag [#allocation3], 1
    %555 = vsyncpa %s554, 1
    %556 = vsyncpa [#allocation6], 1
    %557 = vsyncpa [#allocation9], 1
    %558 = vsyncpa [#allocation4], 1
    %s559 = scalar_lea.sflag [#allocation4], 1
    %560 = vsyncpa %s559, 1
    %561 = vsyncpa [#allocation12], 1
    %s562 = scalar_lea.sflag [#allocation12], 1
    %563 = vsyncpa %s562, 1

// kernel: tpu_custom_call.1
$region0: #{tpu_custom_call.1}
  #allocation0 [shape = 'u32[]', space=smem, size = 0x4, offset = 0x4, fixed_abs, tag = 'smem constant byte address 0x4 - core index']
  #allocation1 [shape = 'u32[72,128]{1,0:T(1,128)}', space=vmem, size = 0x9000, scoped, tag = 'internal scratch']
  %s0 = inlined_call_operand.hbm [shape: bf16[2,8,32], index: 0, kind: input, shape index: {}]
  %s1 = inlined_call_operand.hbm [shape: bf16[32,32], index: 1, kind: input, shape index: {}]
  %s2 = inlined_call_operand.hbm [shape: bf16[32,32], index: 2, kind: input, shape index: {}]
  %s3 = inlined_call_operand.hbm [shape: bf16[32,32], index: 3, kind: input, shape index: {}]
  %s4 = inlined_call_operand.hbm [shape: bf16[2,8,32], index: 4, kind: output, shape index: {0}]
  %s5 = inlined_call_operand.hbm [shape: bf16[2,8,32], index: 5, kind: output, shape index: {1}]
  %s6 = inlined_call_operand.hbm [shape: bf16[2,8,32], index: 6, kind: output, shape index: {2}]
  %7 = xla_tuple %s4, %s5, %s6
  %s8 = sld [smem:[#allocation0]]
  $region81: #{tpu_custom_call.1} parent=0
    _
  %s10 = ssub.s32 1, %s8
  %s11 = scalar_select 0, %s10, %s8
  $region1: #{tpu_custom_call.1} parent=0
    #allocation2 [shape = 'u8[4096]{0}', space=vmem, size = 0x1000, scoped, tag = 'input window, operand 0']
    #allocation3 [shape = 's32[2]{0}', space=sflag, size = 0x8, scoped, tag = 'scoped memory for tpu_custom_call.1']
    #allocation4 [shape = 's32[2]{0}', space=sflag, size = 0x8, scoped, tag = 'scoped memory for tpu_custom_call.1']
    #allocation5 [shape = 'u8[8192]{0}', space=vmem, size = 0x2000, scoped, tag = 'input window, operand 1, single buffered']
    #allocation6 [shape = 's32[1]{0}', space=sflag, size = 0x4, scoped, tag = 'scoped memory for tpu_custom_call.1']
    #allocation7 [shape = 'u8[8192]{0}', space=vmem, size = 0x2000, scoped, tag = 'input window, operand 2, single buffered']
    #allocation8 [shape = 'u8[8192]{0}', space=vmem, size = 0x2000, scoped, tag = 'input window, operand 3, single buffered']
    #allocation9 [shape = 's32[1]{0}', space=sflag, size = 0x4, scoped, tag = 'scoped memory for tpu_custom_call.1']
    #allocation10 [shape = 'u8[4096]{0}', space=vmem, size = 0x1000, scoped, tag = 'output window, operand 0']
    #allocation11 [shape = 'u8[4096]{0}', space=vmem, size = 0x1000, scoped, tag = 'output window, operand 1']
    #allocation12 [shape = 's32[2]{0}', space=sflag, size = 0x8, scoped, tag = 'scoped memory for tpu_custom_call.1']
    #allocation13 [shape = 'u8[4096]{0}', space=vmem, size = 0x1000, scoped, tag = 'output window, operand 2']
    %12 = vsyncpa [#allocation3], 0
    %s13 = scalar_lea.sflag [#allocation3], 1
    %14 = vsyncpa %s13, 0
    %15 = vsyncpa [#allocation6], 0
    %16 = vsyncpa [#allocation9], 0
    %17 = vsyncpa [#allocation4], 0
    %s18 = scalar_lea.sflag [#allocation4], 1
    %19 = vsyncpa %s18, 0
    %20 = vsyncpa [#allocation12], 0
    %s21 = scalar_lea.sflag [#allocation12], 1
    %22 = vsyncpa %s21, 0
    loop: start=0, step=1, limit=4
    $region2: #{tpu_custom_call.1} parent=1 // loop_pre_header
      _
    $region3: #{tpu_custom_call.1} parent=1 // loop_header
      %s24 = sphi 0, %s28
      %p25 = scmp.ge.s32.totalorder %s24, 4
      %s31 = sphi 0, %s43
      %s32 = sphi 0, %s39
      %s33 = sphi 0, %s31
      %s34 = sphi 0, %s32
      %s35 = sphi 0, %s33
      %s36 = sphi 0, %s34
      %s48 = sphi 0, %s50
      %s51 = sphi 0, %s48
      %s52 = sphi 0, %s51
      %s68 = sphi 0, %s52
      %s72 = sphi 0, %s72
      %s74 = sphi 0, %s72
      %s75 = sphi 0, %s74
      %s89 = sphi 0, %s75
      %s93 = sphi 0, %s93
      %s95 = sphi 0, %s93
      %s96 = sphi 0, %s95
      %s110 = sphi 0, %s96
      %s114 = sphi 0, %s114
      %s116 = sphi 0, %s114
      %s117 = sphi 0, %s116
      %s131 = sphi 0, %s117
      %s139 = sphi 0, %s141
      %s142 = sphi 0, %s139
      %s143 = sphi 0, %s142
      %s159 = sphi 0, %s143
      %s167 = sphi 0, %s169
      %s170 = sphi 0, %s167
      %s171 = sphi 0, %s170
      %s187 = sphi 0, %s171
      %s195 = sphi 0, %s197
      %s198 = sphi 0, %s195
      %s199 = sphi 0, %s198
      %s215 = sphi 0, %s199
    $region4: #{tpu_custom_call.1} parent=1 // loop_header_branch
      %27 = sbr.rel (%p25) target = $region8
    $region5: #{tpu_custom_call.1} parent=1 // loop_body
      %s29 = ssub.s32 %s24, 1
      %s30 = ssub.s32 %s24, 2
      %s37 = sadd.s32 1, %s32
      %p38 = scmp.ge.s32.totalorder %s37, 1
      %s39 = scalar_select %p38, 0, %s37
      %s40 = sadd.s32 1, %s31
      %s41 = scalar_select %p38, %s40, %s31
      %p42 = scmp.ge.s32.totalorder %s41, 2
      %s43 = scalar_select %p42, 0, %s41
      %s44 = ssub.s32 %s31, %s43
      %s45 = ssub.s32 %s32, %s39
      %s46 = sor.u32 %s44, %s45
      %p47 = scmp.eq.s32.totalorder %s46, 0
      %s49 = sadd.s32 %s48, 1
      %s50 = scalar_select %p47, %s48, %s49
      %p53 = pneg %p47
      %p54 = scmp.eq.s32.totalorder %s24, 1
      %p55 = por %p53, %p54
      %p56 = scmp.ne.s32.totalorder %s48, %s51
      %p57 = scmp.eq.s32.totalorder %s24, 0
      %p58 = por %p56, %p57
      %p59 = scmp.ne.s32.totalorder %s48, %s51
      %p60 = scmp.eq.s32.totalorder %s29, 1
      %p61 = por %p59, %p60
      %p62 = scmp.ne.s32.totalorder %s51, %s52
      %p63 = scmp.eq.s32.totalorder %s29, 0
      %p64 = por %p62, %p63
      %p65 = scmp.ne.s32.totalorder %s51, %s52
      %p66 = scmp.eq.s32.totalorder %s30, 1
      %p67 = por %p65, %p66
      %p69 = scmp.ne.s32.totalorder %s52, %s68
      %p70 = scmp.eq.s32.totalorder %s30, 0
      %p71 = por %p69, %p70
      %s73 = sadd.s32 %s72, 1
      %p76 = scmp.eq.s32.totalorder %s24, 1
      %p77 = scmp.ne.s32.totalorder %s72, %s74
      %p78 = scmp.eq.s32.totalorder %s24, 0
      %p79 = por %p77, %p78
      %p80 = scmp.ne.s32.totalorder %s72, %s74
      %p81 = scmp.eq.s32.totalorder %s29, 1
      %p82 = por %p80, %p81
      %p83 = scmp.ne.s32.totalorder %s74, %s75
      %p84 = scmp.eq.s32.totalorder %s29, 0
      %p85 = por %p83, %p84
      %p86 = scmp.ne.s32.totalorder %s74, %s75
      %p87 = scmp.eq.s32.totalorder %s30, 1
      %p88 = por %p86, %p87
      %p90 = scmp.ne.s32.totalorder %s75, %s89
      %p91 = scmp.eq.s32.totalorder %s30, 0
      %p92 = por %p90, %p91
      %s94 = sadd.s32 %s93, 1
      %p97 = scmp.eq.s32.totalorder %s24, 1
      %p98 = scmp.ne.s32.totalorder %s93, %s95
      %p99 = scmp.eq.s32.totalorder %s24, 0
      %p100 = por %p98, %p99
      %p101 = scmp.ne.s32.totalorder %s93, %s95
      %p102 = scmp.eq.s32.totalorder %s29, 1
      %p103 = por %p101, %p102
      %p104 = scmp.ne.s32.totalorder %s95, %s96
      %p105 = scmp.eq.s32.totalorder %s29, 0
      %p106 = por %p104, %p105
      %p107 = scmp.ne.s32.totalorder %s95, %s96
      %p108 = scmp.eq.s32.totalorder %s30, 1
      %p109 = por %p107, %p108
      %p111 = scmp.ne.s32.totalorder %s96, %s110
      %p112 = scmp.eq.s32.totalorder %s30, 0
      %p113 = por %p111, %p112
      %s115 = sadd.s32 %s114, 1
      %p118 = scmp.eq.s32.totalorder %s24, 1
      %p119 = scmp.ne.s32.totalorder %s114, %s116
      %p120 = scmp.eq.s32.totalorder %s24, 0
      %p121 = por %p119, %p120
      %p122 = scmp.ne.s32.totalorder %s114, %s116
      %p123 = scmp.eq.s32.totalorder %s29, 1
      %p124 = por %p122, %p123
      %p125 = scmp.ne.s32.totalorder %s116, %s117
      %p126 = scmp.eq.s32.totalorder %s29, 0
      %p127 = por %p125, %p126
      %p128 = scmp.ne.s32.totalorder %s116, %s117
      %p129 = scmp.eq.s32.totalorder %s30, 1
      %p130 = por %p128, %p129
      %p132 = scmp.ne.s32.totalorder %s117, %s131
      %p133 = scmp.eq.s32.totalorder %s30, 0
      %p134 = por %p132, %p133
      %s135 = ssub.s32 %s31, %s43
      %s136 = ssub.s32 %s32, %s39
      %s137 = sor.u32 %s135, %s136
      %p138 = scmp.eq.s32.totalorder %s137, 0
      %s140 = sadd.s32 %s139, 1
      %s141 = scalar_select %p138, %s139, %s140
      %p144 = pneg %p138
      %p145 = scmp.eq.s32.totalorder %s24, 1
      %p146 = por %p144, %p145
      %p147 = scmp.ne.s32.totalorder %s139, %s142
      %p148 = scmp.eq.s32.totalorder %s24, 0
      %p149 = por %p147, %p148
      %p150 = scmp.ne.s32.totalorder %s139, %s142
      %p151 = scmp.eq.s32.totalorder %s29, 1
      %p152 = por %p150, %p151
      %p153 = scmp.ne.s32.totalorder %s142, %s143
      %p154 = scmp.eq.s32.totalorder %s29, 0
      %p155 = por %p153, %p154
      %p156 = scmp.ne.s32.totalorder %s142, %s143
      %p157 = scmp.eq.s32.totalorder %s30, 1
      %p158 = por %p156, %p157
      %p160 = scmp.ne.s32.totalorder %s143, %s159
      %p161 = scmp.eq.s32.totalorder %s30, 0
      %p162 = por %p160, %p161
      %s163 = ssub.s32 %s31, %s43
      %s164 = ssub.s32 %s32, %s39
      %s165 = sor.u32 %s163, %s164
      %p166 = scmp.eq.s32.totalorder %s165, 0
      %s168 = sadd.s32 %s167, 1
      %s169 = scalar_select %p166, %s167, %s168
      %p172 = pneg %p166
      %p173 = scmp.eq.s32.totalorder %s24, 1
      %p174 = por %p172, %p173
      %p175 = scmp.ne.s32.totalorder %s167, %s170
      %p176 = scmp.eq.s32.totalorder %s24, 0
      %p177 = por %p175, %p176
      %p178 = scmp.ne.s32.totalorder %s167, %s170
      %p179 = scmp.eq.s32.totalorder %s29, 1
      %p180 = por %p178, %p179
      %p181 = scmp.ne.s32.totalorder %s170, %s171
      %p182 = scmp.eq.s32.totalorder %s29, 0
      %p183 = por %p181, %p182
      %p184 = scmp.ne.s32.totalorder %s170, %s171
      %p185 = scmp.eq.s32.totalorder %s30, 1
      %p186 = por %p184, %p185
      %p188 = scmp.ne.s32.totalorder %s171, %s187
      %p189 = scmp.eq.s32.totalorder %s30, 0
      %p190 = por %p188, %p189
      %s191 = ssub.s32 %s31, %s43
      %s192 = ssub.s32 %s32, %s39
      %s193 = sor.u32 %s191, %s192
      %p194 = scmp.eq.s32.totalorder %s193, 0
      %s196 = sadd.s32 %s195, 1
      %s197 = scalar_select %p194, %s195, %s196
      %p200 = pneg %p194
      %p201 = scmp.eq.s32.totalorder %s24, 1
      %p202 = por %p200, %p201
      %p203 = scmp.ne.s32.totalorder %s195, %s198
      %p204 = scmp.eq.s32.totalorder %s24, 0
      %p205 = por %p203, %p204
      %p206 = scmp.ne.s32.totalorder %s195, %s198
      %p207 = scmp.eq.s32.totalorder %s29, 1
      %p208 = por %p206, %p207
      %p209 = scmp.ne.s32.totalorder %s198, %s199
      %p210 = scmp.eq.s32.totalorder %s29, 0
      %p211 = por %p209, %p210
      %p212 = scmp.ne.s32.totalorder %s198, %s199
      %p213 = scmp.eq.s32.totalorder %s30, 1
      %p214 = por %p212, %p213
      %p216 = scmp.ne.s32.totalorder %s199, %s215
      %p217 = scmp.eq.s32.totalorder %s30, 0
      %p218 = por %p216, %p217
      %p219 = scmp.le.s32.totalorder 1, %s24
      %p220 = scmp.lt.s32.totalorder %s24, 3
      %p221 = pnand %p219, %p220
      %p222 = pneg %p221
      // Predicated region
      $region9: #{tpu_custom_call.1} parent=5 // pred_check
        _
      $region10: #{tpu_custom_call.1} parent=5 // pred_check_branch
        %224 = sbr.rel (%p221) target = $region12
      $region11: #{tpu_custom_call.1} parent=5 // pred_region
        %s225 = ssub.s32 %s24, 1
        // Predicated region
        $region13: #{tpu_custom_call.1} parent=11 // pred_check
          %p226 = pneg %p85
        $region14: #{tpu_custom_call.1} parent=11 // pred_check_branch
          %228 = sbr.rel (%p226) target = $region16
        $region15: #{tpu_custom_call.1} parent=11 // pred_region
          %230 = vsyncadd [#allocation6], 0
          %s231 = sshll.u32 %s1, 4
          %s232 = int_to_ptr.hbm [resolvable:$true] %s231
          %s233 = sshll.u32 [#allocation5], 4
          %s234 = int_to_ptr.vmem [resolvable:$true] %s233
          %239 = dma.hbm_to_vmem [thread:$0]  %s232, 256, %s234, [#allocation6], 64, 64, 4
        $region16: #{tpu_custom_call.1} parent=11 // pred_fallthru
          _
        // Predicated region
        $region17: #{tpu_custom_call.1} parent=11 // pred_check
          %p240 = pneg %p106
        $region18: #{tpu_custom_call.1} parent=11 // pred_check_branch
          %242 = sbr.rel (%p240) target = $region20
        $region19: #{tpu_custom_call.1} parent=11 // pred_region
          %244 = vsyncadd [#allocation6], 0
          %s245 = sshll.u32 %s2, 4
          %s246 = int_to_ptr.hbm [resolvable:$true] %s245
          %s247 = sshll.u32 [#allocation7], 4
          %s248 = int_to_ptr.vmem [resolvable:$true] %s247
          %253 = dma.hbm_to_vmem [thread:$0]  %s246, 256, %s248, [#allocation6], 64, 64, 4
        $region20: #{tpu_custom_call.1} parent=11 // pred_fallthru
          _
        // Predicated region
        $region21: #{tpu_custom_call.1} parent=11 // pred_check
          %p254 = pneg %p127
        $region22: #{tpu_custom_call.1} parent=11 // pred_check_branch
          %256 = sbr.rel (%p254) target = $region24
        $region23: #{tpu_custom_call.1} parent=11 // pred_region
          %258 = vsyncadd [#allocation9], 0
          %s259 = sshll.u32 %s3, 4
          %s260 = int_to_ptr.hbm [resolvable:$true] %s259
          %s261 = sshll.u32 [#allocation8], 4
          %s262 = int_to_ptr.vmem [resolvable:$true] %s261
          %267 = dma.hbm_to_vmem [thread:$0]  %s260, 256, %s262, [#allocation9], 64, 64, 4
        $region24: #{tpu_custom_call.1} parent=11 // pred_fallthru
          _
      $region12: #{tpu_custom_call.1} parent=5 // pred_fallthru
        _
      %p268 = scmp.lt.s32.totalorder %s24, 2
      // Predicated region
      $region25: #{tpu_custom_call.1} parent=5 // pred_check
        %p269 = pneg %p268
      $region26: #{tpu_custom_call.1} parent=5 // pred_check_branch
        %271 = sbr.rel (%p269) target = $region28
      $region27: #{tpu_custom_call.1} parent=5 // pred_region
        // Predicated region
        $region29: #{tpu_custom_call.1} parent=27 // pred_check
          %p272 = pneg %p58
        $region30: #{tpu_custom_call.1} parent=27 // pred_check_branch
          %274 = sbr.rel (%p272) target = $region32
        $region31: #{tpu_custom_call.1} parent=27 // pred_region
          %s275 = sand.u32 %s48, 1
          %s276 = scalar_lea.sflag [#allocation3], %s275
          %s277 = sand.u32 %s48, 1
          %s278 = smul.addr %s277, 4
          %s279 = scalar_lea.vmem [#allocation2], %s278
          %281 = vsyncadd %s276, 0
          %s282 = sadd.s32 %s32, %s31
          %s283 = smul.addr %s282, 4
          %s284 = scalar_lea.hbm %s0, %s283
          %s286 = sshll.u32 %s284, 4
          %s287 = int_to_ptr.hbm [resolvable:$true] %s286
          %s288 = sshll.u32 %s279, 4
          %s289 = int_to_ptr.vmem [resolvable:$true] %s288
          %291 = dma.hbm_to_vmem [thread:$0]  %s287, 64, %s289, %s276
        $region32: #{tpu_custom_call.1} parent=27 // pred_fallthru
          _
      $region28: #{tpu_custom_call.1} parent=5 // pred_fallthru
        _
      %p292 = scmp.le.s32.totalorder 1, %s24
      %p293 = scmp.lt.s32.totalorder %s24, 3
      %p294 = pnand %p292, %p293
      %p295 = pneg %p294
      // Predicated region
      $region33: #{tpu_custom_call.1} parent=5 // pred_check
        _
      $region34: #{tpu_custom_call.1} parent=5 // pred_check_branch
        %297 = sbr.rel (%p294) target = $region36
      $region35: #{tpu_custom_call.1} parent=5 // pred_region
        %s298 = ssub.s32 %s24, 1
        %s299 = sand.u32 %s51, 1
        %s300 = scalar_lea.sflag [#allocation3], %s299
        %s301 = sand.u32 %s51, 1
        %s302 = smul.addr %s301, 4
        %s303 = scalar_lea.vmem [#allocation2], %s302
        // Predicated region
        $region37: #{tpu_custom_call.1} parent=35 // pred_check
          %p304 = pneg %p64
        $region38: #{tpu_custom_call.1} parent=35 // pred_check_branch
          %306 = sbr.rel (%p304) target = $region40
        $region39: #{tpu_custom_call.1} parent=35 // pred_region
          %308 = dma.done %s300, 64
        $region40: #{tpu_custom_call.1} parent=35 // pred_fallthru
          _
        // Predicated region
        $region41: #{tpu_custom_call.1} parent=35 // pred_check
          %p309 = pneg %p85
        $region42: #{tpu_custom_call.1} parent=35 // pred_check_branch
          %311 = sbr.rel (%p309) target = $region44
        $region43: #{tpu_custom_call.1} parent=35 // pred_region
          %313 = dma.done [#allocation6], 256
        $region44: #{tpu_custom_call.1} parent=35 // pred_fallthru
          _
        // Predicated region
        $region45: #{tpu_custom_call.1} parent=35 // pred_check
          %p314 = pneg %p106
        $region46: #{tpu_custom_call.1} parent=35 // pred_check_branch
          %316 = sbr.rel (%p314) target = $region48
        $region47: #{tpu_custom_call.1} parent=35 // pred_region
          %318 = dma.done [#allocation6], 256
        $region48: #{tpu_custom_call.1} parent=35 // pred_fallthru
          _
        // Predicated region
        $region49: #{tpu_custom_call.1} parent=35 // pred_check
          %p319 = pneg %p127
        $region50: #{tpu_custom_call.1} parent=35 // pred_check_branch
          %321 = sbr.rel (%p319) target = $region52
        $region51: #{tpu_custom_call.1} parent=35 // pred_region
          %323 = dma.done [#allocation9], 256
        $region52: #{tpu_custom_call.1} parent=35 // pred_fallthru
          _
        %s324 = sand.u32 %s51, 1
        %s325 = scalar_lea.sflag [#allocation3], %s324
        %s326 = sand.u32 %s51, 1
        %s327 = smul.addr %s326, 4
        %s328 = scalar_lea.vmem [#allocation2], %s327
        %p329 = pneg %p64
        %p330 = pneg %p61
        %p331 = pneg %p85
        %p332 = pneg %p82
        %p333 = pneg %p106
        %p334 = pneg %p103
        %p335 = pneg %p127
        %p336 = pneg %p124
        %p337 = pneg %p155
        %p338 = pneg %p152
        %s339 = sand.u32 %s142, 1
        %s340 = scalar_lea.sflag [#allocation4], %s339
        %s341 = sand.u32 %s142, 1
        %s342 = smul.addr %s341, 4
        %s343 = scalar_lea.vmem [#allocation10], %s342
        %p344 = pneg %p183
        %p345 = pneg %p180
        %s346 = sand.u32 %s29, 1
        %s347 = scalar_lea.sflag [#allocation12], %s346
        %s348 = sand.u32 %s170, 1
        %s349 = smul.addr %s348, 4
        %s350 = scalar_lea.vmem [#allocation11], %s349
        %p351 = pneg %p211
        %p352 = pneg %p208
        %s353 = sand.u32 %s29, 1
        %s354 = scalar_lea.sflag [#allocation12], %s353
        %s355 = sand.u32 %s198, 1
        %s356 = smul.addr %s355, 4
        %s357 = scalar_lea.vmem [#allocation13], %s356
        %v359 = vld [vmem:[%s303] sm:$0xf]
        %v360 = vld [vmem:[#allocation5] sm:$0xf]
        %v361 = vld [vmem:[#allocation5 + $0x4] sm:$0xf]
        %v362 = vld [vmem:[#allocation5 + $0x8] sm:$0xf]
        %v363 = vld [vmem:[#allocation5 + $0xc] sm:$0xf]
        %v368 = vunpack.c.l.b16 %v360
        %v369 = vunpack.c.l.b16 %v361
        %v370 = vunpack.c.l.b16 %v362
        %v371 = vunpack.c.l.b16 %v363
        %v372 = vpack.c.b16 %v369, %v368
        %v373 = vpack.c.b16 %v371, %v370
        %vm376 = vcmask 261120
        %v378 = vsel %vm376, %v359, 0
        %380 = vmatpush.bf16.msra.mxu0 0
        %381 = vmatpush.bf16.msra.mxu0 0
        %382 = vmatpush.bf16.msra.mxu0 0
        %383 = vmatpush.bf16.msra.mxu0 0
        %384 = vmatpush.bf16.msra.mxu0 0
        %385 = vmatpush.bf16.msra.mxu0 0
        %386 = vmatpush.bf16.msra.mxu0 %v373
        %387 = vmatpush.bf16.msra.mxu0 %v372
        %388 = vmatmul.bf16.gmra.mxu0 %v378
        %v389 = vpop.f32.mrf.mxu0
        %v390 = vadd.f32 0.0, %v389
        %v391 = vpop.f32.mrf.mxu0
        %392 = vdwg.mxu0
        %v393 = vpack.c.bf16 %v390, %v390
        %vm394 = vcmask 257024
        %395 = vst.msk [vmem:[%s343] sm:$0xf] %vm394, %v393
        %v396 = vld [vmem:[#allocation7] sm:$0xf]
        %v397 = vld [vmem:[#allocation7 + $0x4] sm:$0xf]
        %v398 = vld [vmem:[#allocation7 + $0x8] sm:$0xf]
        %v399 = vld [vmem:[#allocation7 + $0xc] sm:$0xf]
        %v404 = vunpack.c.l.b16 %v396
        %v405 = vunpack.c.l.b16 %v397
        %v406 = vunpack.c.l.b16 %v398
        %v407 = vunpack.c.l.b16 %v399
        %v408 = vpack.c.b16 %v405, %v404
        %v409 = vpack.c.b16 %v407, %v406
        %412 = vmatpush.bf16.msra.mxu0 0
        %413 = vmatpush.bf16.msra.mxu0 0
        %414 = vmatpush.bf16.msra.mxu0 0
        %415 = vmatpush.bf16.msra.mxu0 0
        %416 = vmatpush.bf16.msra.mxu0 0
        %417 = vmatpush.bf16.msra.mxu0 0
        %418 = vmatpush.bf16.msra.mxu0 %v409
        %419 = vmatpush.bf16.msra.mxu0 %v408
        %420 = vmatmul.bf16.gmra.mxu0 %v378
        %v421 = vpop.f32.mrf.mxu0
        %v422 = vadd.f32 0.0, %v421
        %v423 = vpop.f32.mrf.mxu0
        %424 = vdwg.mxu0
        %v425 = vpack.c.bf16 %v422, %v422
        %426 = vst.msk [vmem:[%s350] sm:$0xf] %vm394, %v425
        %v427 = vld [vmem:[#allocation8] sm:$0xf]
        %v428 = vld [vmem:[#allocation8 + $0x4] sm:$0xf]
        %v429 = vld [vmem:[#allocation8 + $0x8] sm:$0xf]
        %v430 = vld [vmem:[#allocation8 + $0xc] sm:$0xf]
        %v435 = vunpack.c.l.b16 %v427
        %v436 = vunpack.c.l.b16 %v428
        %v437 = vunpack.c.l.b16 %v429
        %v438 = vunpack.c.l.b16 %v430
        %v439 = vpack.c.b16 %v436, %v435
        %v440 = vpack.c.b16 %v438, %v437
        %443 = vmatpush.bf16.msra.mxu0 0
        %444 = vmatpush.bf16.msra.mxu0 0
        %445 = vmatpush.bf16.msra.mxu0 0
        %446 = vmatpush.bf16.msra.mxu0 0
        %447 = vmatpush.bf16.msra.mxu0 0
        %448 = vmatpush.bf16.msra.mxu0 0
        %449 = vmatpush.bf16.msra.mxu0 %v440
        %450 = vmatpush.bf16.msra.mxu0 %v439
        %451 = vmatmul.bf16.gmra.mxu0 %v378
        %v452 = vpop.f32.mrf.mxu0
        %v453 = vadd.f32 0.0, %v452
        %v454 = vpop.f32.mrf.mxu0
        %455 = vdwg.mxu0
        %v456 = vpack.c.bf16 %v453, %v453
        %457 = vst.msk [vmem:[%s357] sm:$0xf] %vm394, %v456
        %s458 = sand.u32 %s142, 1
        %s459 = scalar_lea.sflag [#allocation4], %s458
        %s460 = sand.u32 %s142, 1
        %s461 = smul.addr %s460, 4
        %s462 = scalar_lea.vmem [#allocation10], %s461
        %s463 = sand.u32 %s29, 1
        %s464 = scalar_lea.sflag [#allocation12], %s463
        %s465 = sand.u32 %s170, 1
        %s466 = smul.addr %s465, 4
        %s467 = scalar_lea.vmem [#allocation11], %s466
        %s468 = sand.u32 %s29, 1
        %s469 = scalar_lea.sflag [#allocation12], %s468
        %s470 = sand.u32 %s198, 1
        %s471 = smul.addr %s470, 4
        %s472 = scalar_lea.vmem [#allocation13], %s471
        // Predicated region
        $region53: #{tpu_custom_call.1} parent=35 // pred_check
          %p473 = pneg %p152
        $region54: #{tpu_custom_call.1} parent=35 // pred_check_branch
          %475 = sbr.rel (%p473) target = $region56
        $region55: #{tpu_custom_call.1} parent=35 // pred_region
          %477 = vsyncadd %s459, 0
          %s478 = sadd.s32 %s34, %s33
          %s479 = smul.addr %s478, 4
          %s480 = scalar_lea.hbm %s4, %s479
          %s482 = sshll.u32 %s462, 4
          %s483 = int_to_ptr.vmem [resolvable:$true] %s482
          %s484 = sshll.u32 %s480, 4
          %s485 = int_to_ptr.hbm [resolvable:$true] %s484
          %487 = dma.vmem_to_hbm [thread:$0]  %s483, 64, %s485, %s459
        $region56: #{tpu_custom_call.1} parent=35 // pred_fallthru
          _
        // Predicated region
        $region57: #{tpu_custom_call.1} parent=35 // pred_check
          %p488 = pneg %p180
        $region58: #{tpu_custom_call.1} parent=35 // pred_check_branch
          %490 = sbr.rel (%p488) target = $region60
        $region59: #{tpu_custom_call.1} parent=35 // pred_region
          %492 = vsyncadd %s464, 0
          %s493 = sadd.s32 %s34, %s33
          %s494 = smul.addr %s493, 4
          %s495 = scalar_lea.hbm %s5, %s494
          %s497 = sshll.u32 %s467, 4
          %s498 = int_to_ptr.vmem [resolvable:$true] %s497
          %s499 = sshll.u32 %s495, 4
          %s500 = int_to_ptr.hbm [resolvable:$true] %s499
          %502 = dma.vmem_to_hbm [thread:$0]  %s498, 64, %s500, %s464
        $region60: #{tpu_custom_call.1} parent=35 // pred_fallthru
          _
        // Predicated region
        $region61: #{tpu_custom_call.1} parent=35 // pred_check
          %p503 = pneg %p208
        $region62: #{tpu_custom_call.1} parent=35 // pred_check_branch
          %505 = sbr.rel (%p503) target = $region64
        $region63: #{tpu_custom_call.1} parent=35 // pred_region
          %507 = vsyncadd %s469, 0
          %s508 = sadd.s32 %s34, %s33
          %s509 = smul.addr %s508, 4
          %s510 = scalar_lea.hbm %s6, %s509
          %s512 = sshll.u32 %s472, 4
          %s513 = int_to_ptr.vmem [resolvable:$true] %s512
          %s514 = sshll.u32 %s510, 4
          %s515 = int_to_ptr.hbm [resolvable:$true] %s514
          %517 = dma.vmem_to_hbm [thread:$0]  %s513, 64, %s515, %s469
        $region64: #{tpu_custom_call.1} parent=35 // pred_fallthru
          _
      $region36: #{tpu_custom_call.1} parent=5 // pred_fallthru
        _
      %p518 = scmp.le.s32.totalorder 2, %s24
      // Predicated region
      $region65: #{tpu_custom_call.1} parent=5 // pred_check
        %p519 = pneg %p518
      $region66: #{tpu_custom_call.1} parent=5 // pred_check_branch
        %521 = sbr.rel (%p519) target = $region68
      $region67: #{tpu_custom_call.1} parent=5 // pred_region
        %s522 = ssub.s32 %s24, 2
        // Predicated region
        $region69: #{tpu_custom_call.1} parent=67 // pred_check
          %p523 = pneg %p158
        $region70: #{tpu_custom_call.1} parent=67 // pred_check_branch
          %525 = sbr.rel (%p523) target = $region72
        $region71: #{tpu_custom_call.1} parent=67 // pred_region
          %s526 = sand.u32 %s143, 1
          %s527 = scalar_lea.sflag [#allocation4], %s526
          %s528 = sand.u32 %s143, 1
          %s529 = smul.addr %s528, 4
          %s530 = scalar_lea.vmem [#allocation10], %s529
          %532 = dma.done %s527, 64
        $region72: #{tpu_custom_call.1} parent=67 // pred_fallthru
          _
        // Predicated region
        $region73: #{tpu_custom_call.1} parent=67 // pred_check
          %p533 = pneg %p186
        $region74: #{tpu_custom_call.1} parent=67 // pred_check_branch
          %535 = sbr.rel (%p533) target = $region76
        $region75: #{tpu_custom_call.1} parent=67 // pred_region
          %s536 = sand.u32 %s30, 1
          %s537 = scalar_lea.sflag [#allocation12], %s536
          %s538 = sand.u32 %s171, 1
          %s539 = smul.addr %s538, 4
          %s540 = scalar_lea.vmem [#allocation11], %s539
          %542 = dma.done %s537, 64
        $region76: #{tpu_custom_call.1} parent=67 // pred_fallthru
          _
        // Predicated region
        $region77: #{tpu_custom_call.1} parent=67 // pred_check
          %p543 = pneg %p214
        $region78: #{tpu_custom_call.1} parent=67 // pred_check_branch
          %545 = sbr.rel (%p543) target = $region80
        $region79: #{tpu_custom_call.1} parent=67 // pred_region
          %s546 = sand.u32 %s30, 1
          %s547 = scalar_lea.sflag [#allocation12], %s546
          %s548 = sand.u32 %s199, 1
          %s549 = smul.addr %s548, 4
          %s550 = scalar_lea.vmem [#allocation13], %s549
          %552 = dma.done %s547, 64
        $region80: #{tpu_custom_call.1} parent=67 // pred_fallthru
          _
      $region68: #{tpu_custom_call.1} parent=5 // pred_fallthru
        _
    $region6: #{tpu_custom_call.1} parent=1 // loop_footer
      %s28 = sadd.s32 1, %s24
    $region7: #{tpu_custom_call.1} parent=1 // loop_footer_branch
      %23 = sbr.rel target = $region3
    $region8: #{tpu_custom_call.1} parent=1 // loop_exit
      _
    %553 = vsyncpa [#allocation3], 1
    %s554 = scalar_lea.sflag [#allocation3], 1
    %555 = vsyncpa %s554, 1
    %556 = vsyncpa [#allocation6], 1
    %557 = vsyncpa [#allocation9], 1
    %558 = vsyncpa [#allocation4], 1
    %s559 = scalar_lea.sflag [#allocation4], 1
    %560 = vsyncpa %s559, 1
    %561 = vsyncpa [#allocation12], 1
    %s562 = scalar_lea.sflag [#allocation12], 1
    %563 = vsyncpa %s562, 1

</llo_original>
